<compile_context>
chip_gen: v7x
topology: tpu7x:2x2x1
jax: 0.10.0
libtpu: 0.0.40
codegen_flags: <defaults>
</compile_context>

<pallas_src>
import functools

import jax
import jax.numpy as jnp
from jax import lax
from jax.experimental import pallas as pl
from jax.experimental.pallas import tpu as pltpu


def attention_kernel(hid_ref, enc_ref, whT_ref, weT_ref, b_ref, v_ref, out_ref, *, src_len):
    """One TB-sized slab of the batch per grid step.

    hid_ref : [TB, H]       bf16  decoder hidden states
    enc_ref : [TB, Sp, H]   bf16  encoder outputs (Sp = src_len padded to a 128 multiple)
    whT_ref : [H, H]        bf16  attn-weight columns acting on `hidden`          (pre-transposed)
    weT_ref : [H, H]        bf16  attn-weight columns acting on encoder outputs   (pre-transposed)
    b_ref   : [1, H]        f32   attn bias
    v_ref   : [1, H]        bf16  scoring vector v
    out_ref : [TB, 1, Sp]   f32   softmax attention weights over source positions
    """
    TB, Sp, H = enc_ref.shape

    # hidden is repeated across src_len in the reference; its projection is shared -> once per row.
    hid_proj = (jnp.dot(hid_ref[...], whT_ref[...],
                        preferred_element_type=jnp.float32)
                + b_ref[...])                                            # [TB, H] f32

    # Encoder projection as one big MXU dot; merging (TB, Sp) -> sublanes is free (Sp % 8 == 0).
    enc_flat = enc_ref[...].reshape(TB * Sp, H)
    enc_proj = jnp.dot(enc_flat, weT_ref[...],
                       preferred_element_type=jnp.float32)               # [TB*Sp, H] f32
    energy = jnp.tanh(enc_proj.reshape(TB, Sp, H) + hid_proj[:, None, :])  # [TB, Sp, H] f32 (EUP)

    # scores[b, s] = v . energy[b, s, :]  — flash-attention-style last-dim contraction,
    # produces scores lane-major (source positions on lanes) without an XLU transpose.
    v3 = jnp.broadcast_to(v_ref[...].reshape(1, 1, H), (TB, 1, H))        # bf16
    scores = jnp.einsum("bqh,bsh->bqs", v3, energy.astype(jnp.bfloat16),
                        preferred_element_type=jnp.float32)               # [TB, 1, Sp] f32

    # Mask padded source positions, then softmax over the lane axis (all f32).
    lane = lax.broadcasted_iota(jnp.int32, (TB, 1, Sp), 2)
    scores = jnp.where(lane < src_len, scores, -1e30)
    m = jnp.max(scores, axis=-1, keepdims=True)
    e = jnp.exp(scores - m)
    inv = pl.reciprocal(jnp.sum(e, axis=-1, keepdims=True), approx=True)  # EUP slot
    out_ref[...] = e * inv


def _pick_tb(B, S_pad, H, vmem_budget=8 * 1024 * 1024):
    """Batch rows per grid step.

    Aim for >= 256 MXU result rows per step (tb * S_pad), cap the (double-buffered) bf16
    encoder slab at `vmem_budget`, and respect the sublane rule: the (tb, ...) blocks need
    tb % 8 == 0 or tb == B, and tb must divide B.
    """
    per_row = S_pad * H * 2                       # bf16 encoder bytes per batch row
    cap = max(1, vmem_budget // per_row)
    want = max(1, -(-256 // S_pad))               # MXU fill target
    target = min(B, max(want, 1), cap)
    for t in range(target, 0, -1):
        if B % t == 0 and (t == B or t % 8 == 0):
            return t
    for t in range(target + 1, B):
        if B % t == 0 and t % 8 == 0:
            return t
    return B


def attention_forward(hidden, encoder_outputs, params, *, tb=None):
    """hidden: [B, H] f32, encoder_outputs: [B, S, H] f32 -> attn weights [B, S] f32."""
    B, S, H = encoder_outputs.shape
    w, b, v = params["attn_w"], params["attn_b"], params["v"]   # [H, 2H], [H], [H]

    # Pad the source axis to a lane multiple so scores / softmax / stores are lane-dense.
    S_pad = -(-S // 128) * 128

    # Split Linear(2H -> H): first H input columns act on `hidden`, last H on encoder outputs
    # (algebraically identical to the repeat+concat in the reference). bf16 for MXU operands;
    # the bias stays f32 (added to the f32 accumulator).
    whT = jnp.transpose(w[:, :H]).astype(jnp.bfloat16)       # [H, H]
    weT = jnp.transpose(w[:, H:]).astype(jnp.bfloat16)       # [H, H]
    b2 = b[None, :].astype(jnp.float32)                      # [1, H]
    v2 = v[None, :].astype(jnp.bfloat16)                     # [1, H]

    hid = hidden.astype(jnp.bfloat16)                        # [B, H]
    enc = encoder_outputs.astype(jnp.bfloat16)               # [B, S, H]
    if S_pad != S:
        enc = jnp.pad(enc, ((0, 0), (0, S_pad - S), (0, 0)))  # zero-pad source positions

    if tb is None:
        tb = _pick_tb(B, S_pad, H)
    assert B % tb == 0, (B, tb)

    kernel = functools.partial(attention_kernel, src_len=S)
    out = pl.pallas_call(
        kernel,
        out_shape=jax.ShapeDtypeStruct((B, 1, S_pad), jnp.float32),
        grid=(B // tb,),
        in_specs=[
            pl.BlockSpec((tb, H), lambda i: (i, 0)),             # hidden, TB rows per step
            pl.BlockSpec((tb, S_pad, H), lambda i: (i, 0, 0)),   # encoder outputs, TB rows
            pl.BlockSpec((H, H), lambda i: (0, 0)),              # whT (VMEM-resident)
            pl.BlockSpec((H, H), lambda i: (0, 0)),              # weT (VMEM-resident)
            pl.BlockSpec((1, H), lambda i: (0, 0)),              # bias (resident)
            pl.BlockSpec((1, H), lambda i: (0, 0)),              # v   (resident)
        ],
        out_specs=pl.BlockSpec((tb, 1, S_pad), lambda i: (i, 0, 0)),
        compiler_params=pltpu.CompilerParams(
            # batch axis shards across the 2 TensorCores on v7x; serial loop on v5e/v6e.
            dimension_semantics=("parallel",),
            # NOTE: for large S*H also set vmem_limit_bytes and tile S with an online softmax;
            # at the shapes exercised here the default scoped VMEM is ample.
        ),
    )(hid, enc, whT, weT, b2, v2)
    return out[:, 0, :S]                                         # [B, S]


def attention_ref(hidden, encoder_outputs, params):
    """Pure-JAX f32 reference mirroring the PyTorch module exactly."""
    B, S, H = encoder_outputs.shape
    w, b, v = params["attn_w"], params["attn_b"], params["v"]
    hid_rep = jnp.repeat(hidden[:, None, :], S, axis=1)             # [B, S, H]
    cat = jnp.concatenate([hid_rep, encoder_outputs], axis=2)       # [B, S, 2H]
    energy = jnp.tanh(jnp.einsum("bsk,hk->bsh", cat, w) + b)        # [B, S, H]
    scores = jnp.einsum("bsh,h->bs", energy, v)                     # [B, S]
    return jax.nn.softmax(scores, axis=1)


def init_params(key, hidden_dim):
    k_w, k_b, k_v = jax.random.split(key, 3)
    bound = 1.0 / jnp.sqrt(2.0 * hidden_dim)   # nn.Linear(2H, H) default init range
    return {
        "attn_w": jax.random.uniform(k_w, (hidden_dim, 2 * hidden_dim),
                                     jnp.float32, -bound, bound),
        "attn_b": jax.random.uniform(k_b, (hidden_dim,), jnp.float32, -bound, bound),
        "v": jax.random.uniform(k_v, (hidden_dim,), jnp.float32, 0.0, 1.0),  # torch.rand
    }


if __name__ == "__main__":
    B, S, H = 2, 8, 32

    key = jax.random.PRNGKey(0)
    k_params, k_hid, k_enc = jax.random.split(key, 3)
    params = init_params(k_params, H)
    hidden = jax.random.normal(k_hid, (B, H), jnp.float32)
    encoder_outputs = jax.random.normal(k_enc, (B, S, H), jnp.float32)

    attn = jax.jit(attention_forward)(hidden, encoder_outputs, params)
    attn = jax.block_until_ready(attn)

    assert attn.shape == (B, S), attn.shape
    assert attn.dtype == jnp.float32

    ref = attention_ref(hidden, encoder_outputs, params)
    # bf16 MXU operands + approximate EUP reciprocal -> loosened tolerances vs the f32 reference.
    assert jnp.allclose(attn, ref, atol=3e-2, rtol=3e-2), float(jnp.max(jnp.abs(attn - ref)))
    assert jnp.allclose(jnp.sum(attn, axis=1), 1.0, atol=1e-2)

    print("KERNEL_OK")
</pallas_src>

<mosaic_0001>
module attributes {stable_mosaic.version = 11 : i64} {
  func.func @attention_kernel(%arg0: i32, %arg1: memref<2x32xbf16, #tpu.memory_space<vmem>>, %arg2: memref<2x128x32xbf16, #tpu.memory_space<vmem>>, %arg3: memref<32x32xbf16, #tpu.memory_space<vmem>>, %arg4: memref<32x32xbf16, #tpu.memory_space<vmem>>, %arg5: memref<1x32xf32, #tpu.memory_space<vmem>>, %arg6: memref<1x32xbf16, #tpu.memory_space<vmem>>, %arg7: memref<2x1x128xf32, #tpu.memory_space<vmem>>) attributes {dimension_semantics = [#tpu.dimension_semantics<parallel>], iteration_bounds = array<i64: 1>, scalar_prefetch = 0 : i64, scratch_operands = 0 : i64, tpu.core_type = #tpu.core_type<tc>, window_params = [{transform_indices = @transform_0, window_bounds = array<i64: 2, 32>}, {transform_indices = @transform_1, window_bounds = array<i64: 2, 128, 32>}, {pipeline_mode = #tpu.pipeline_mode<synchronous>, transform_indices = @transform_2, window_bounds = array<i64: 32, 32>}, {pipeline_mode = #tpu.pipeline_mode<synchronous>, transform_indices = @transform_3, window_bounds = array<i64: 32, 32>}, {pipeline_mode = #tpu.pipeline_mode<synchronous>, transform_indices = @transform_4, window_bounds = array<i64: 1, 32>}, {pipeline_mode = #tpu.pipeline_mode<synchronous>, transform_indices = @transform_5, window_bounds = array<i64: 1, 32>}, {transform_indices = @transform_6, window_bounds = array<i64: 2, 1, 128>}]} {
    %c0 = arith.constant 0 : index
    %c0_0 = arith.constant 0 : index
    %0 = vector.load %arg1[%c0, %c0_0] : memref<2x32xbf16, #tpu.memory_space<vmem>>, vector<2x32xbf16>
    %c0_1 = arith.constant 0 : index
    %c0_2 = arith.constant 0 : index
    %1 = vector.load %arg3[%c0_1, %c0_2] : memref<32x32xbf16, #tpu.memory_space<vmem>>, vector<32x32xbf16>
    %cst = arith.constant dense<0.000000e+00> : vector<2x32xf32>
    %2 = tpu.matmul %0, %1, %cst {dimension_numbers = #tpu.dot_dimension_numbers<[1], [0], [0], [1], [0, 0, 1, 1], [], []>} : vector<2x32xbf16>, vector<32x32xbf16>, vector<2x32xf32> -> vector<2x32xf32>
    %c0_3 = arith.constant 0 : index
    %c0_4 = arith.constant 0 : index
    %3 = vector.load %arg5[%c0_3, %c0_4] : memref<1x32xf32, #tpu.memory_space<vmem>>, vector<1x32xf32>
    %4 = vector.broadcast %3 : vector<1x32xf32> to vector<2x32xf32>
    %5 = arith.addf %2, %4 : vector<2x32xf32>
    %c0_5 = arith.constant 0 : index
    %c0_6 = arith.constant 0 : index
    %c0_7 = arith.constant 0 : index
    %6 = vector.load %arg2[%c0_5, %c0_6, %c0_7] : memref<2x128x32xbf16, #tpu.memory_space<vmem>>, vector<2x128x32xbf16>
    %7 = vector.shape_cast %6 : vector<2x128x32xbf16> to vector<256x32xbf16>
    %c0_8 = arith.constant 0 : index
    %c0_9 = arith.constant 0 : index
    %8 = vector.load %arg4[%c0_8, %c0_9] : memref<32x32xbf16, #tpu.memory_space<vmem>>, vector<32x32xbf16>
    %cst_10 = arith.constant dense<0.000000e+00> : vector<256x32xf32>
    %9 = tpu.matmul %7, %8, %cst_10 {dimension_numbers = #tpu.dot_dimension_numbers<[1], [0], [0], [1], [0, 0, 1, 1], [], []>} : vector<256x32xbf16>, vector<32x32xbf16>, vector<256x32xf32> -> vector<256x32xf32>
    %10 = vector.shape_cast %9 : vector<256x32xf32> to vector<2x128x32xf32>
    %11 = vector.shape_cast %5 : vector<2x32xf32> to vector<2x1x32xf32>
    %12 = vector.broadcast %11 : vector<2x1x32xf32> to vector<2x128x32xf32>
    %13 = arith.addf %10, %12 : vector<2x128x32xf32>
    %14 = math.tanh %13 : vector<2x128x32xf32>
    %c0_11 = arith.constant 0 : index
    %c0_12 = arith.constant 0 : index
    %15 = vector.load %arg6[%c0_11, %c0_12] : memref<1x32xbf16, #tpu.memory_space<vmem>>, vector<1x32xbf16>
    %16 = vector.shape_cast %15 : vector<1x32xbf16> to vector<1x1x32xbf16>
    %17 = vector.shape_cast %16 : vector<1x1x32xbf16> to vector<1x1x32xbf16>
    %18 = vector.broadcast %17 : vector<1x1x32xbf16> to vector<2x1x32xbf16>
    %19 = arith.truncf %14 : vector<2x128x32xf32> to vector<2x128x32xbf16>
    "tpu.trace_start"() <{level = 10 : i32, message = "bqh,bsh->bqs"}> : () -> ()
    %cst_13 = arith.constant dense<0.000000e+00> : vector<2x1x128xf32>
    %20 = tpu.matmul %18, %19, %cst_13 {dimension_numbers = #tpu.dot_dimension_numbers<[2], [2], [1], [1], [0, 0, 0, 1, 1, 1], [0], [0]>} : vector<2x1x32xbf16>, vector<2x128x32xbf16>, vector<2x1x128xf32> -> vector<2x1x128xf32>
    "tpu.trace_stop"() : () -> ()
    %21 = tpu.iota {dimensions = array<i32: 2>} : vector<2x1x128xi32>
    %c8_i32 = arith.constant 8 : i32
    %22 = vector.broadcast %c8_i32 : i32 to vector<2x1x128xi32>
    %23 = arith.cmpi slt, %21, %22 : vector<2x1x128xi32>
    %cst_14 = arith.constant -1.000000e+30 : f32
    %24 = vector.broadcast %cst_14 : f32 to vector<2x1x128xf32>
    %25 = arith.select %23, %20, %24 : vector<2x1x128xi1>, vector<2x1x128xf32>
    %cst_15 = arith.constant dense<0xFF800000> : vector<2x1xf32>
    %26 = vector.multi_reduction <maximumf>, %25, %cst_15 [2] : vector<2x1x128xf32> to vector<2x1xf32>
    %27 = vector.shape_cast %26 : vector<2x1xf32> to vector<2x1x1xf32>
    %28 = vector.broadcast %27 : vector<2x1x1xf32> to vector<2x1x128xf32>
    %29 = arith.subf %25, %28 : vector<2x1x128xf32>
    %30 = math.exp %29 : vector<2x1x128xf32>
    %cst_16 = arith.constant dense<0.000000e+00> : vector<2x1xf32>
    %31 = vector.multi_reduction <add>, %30, %cst_16 [2] : vector<2x1x128xf32> to vector<2x1xf32>
    %32 = vector.shape_cast %31 : vector<2x1xf32> to vector<2x1x1xf32>
    %33 = tpu.reciprocal %32 {approx = true} : vector<2x1x1xf32> -> vector<2x1x1xf32>
    %34 = vector.broadcast %33 : vector<2x1x1xf32> to vector<2x1x128xf32>
    %35 = arith.mulf %30, %34 : vector<2x1x128xf32>
    %c0_17 = arith.constant 0 : index
    %c0_18 = arith.constant 0 : index
    %c0_19 = arith.constant 0 : index
    %36 = vector.load %arg7[%c0_17, %c0_18, %c0_19] : memref<2x1x128xf32, #tpu.memory_space<vmem>>, vector<2x1x128xf32>
    tpu.vector_store %arg7[%c0_17, %c0_18, %c0_19], %35 {strides = array<i32>} : memref<2x1x128xf32, #tpu.memory_space<vmem>>, vector<2x1x128xf32>,
    return
  }
  func.func @transform_0(%arg0: i32) -> (i32, i32) {
    %c0_i32 = arith.constant 0 : i32
    %c0_i32_0 = arith.constant 0 : i32
    return %arg0, %c0_i32 : i32, i32
  }
  func.func @transform_1(%arg0: i32) -> (i32, i32, i32) {
    %c0_i32 = arith.constant 0 : i32
    %c0_i32_0 = arith.constant 0 : i32
    %c0_i32_1 = arith.constant 0 : i32
    return %arg0, %c0_i32, %c0_i32_0 : i32, i32, i32
  }
  func.func @transform_2(%arg0: i32) -> (i32, i32) {
    %c0_i32 = arith.constant 0 : i32
    %c0_i32_0 = arith.constant 0 : i32
    %c0_i32_1 = arith.constant 0 : i32
    return %c0_i32, %c0_i32_0 : i32, i32
  }
  func.func @transform_3(%arg0: i32) -> (i32, i32) {
    %c0_i32 = arith.constant 0 : i32
    %c0_i32_0 = arith.constant 0 : i32
    %c0_i32_1 = arith.constant 0 : i32
    return %c0_i32, %c0_i32_0 : i32, i32
  }
  func.func @transform_4(%arg0: i32) -> (i32, i32) {
    %c0_i32 = arith.constant 0 : i32
    %c0_i32_0 = arith.constant 0 : i32
    %c0_i32_1 = arith.constant 0 : i32
    return %c0_i32, %c0_i32_0 : i32, i32
  }
  func.func @transform_5(%arg0: i32) -> (i32, i32) {
    %c0_i32 = arith.constant 0 : i32
    %c0_i32_0 = arith.constant 0 : i32
    %c0_i32_1 = arith.constant 0 : i32
    return %c0_i32, %c0_i32_0 : i32, i32
  }
  func.func @transform_6(%arg0: i32) -> (i32, i32, i32) {
    %c0_i32 = arith.constant 0 : i32
    %c0_i32_0 = arith.constant 0 : i32
    %c0_i32_1 = arith.constant 0 : i32
    return %arg0, %c0_i32, %c0_i32_0 : i32, i32, i32
  }
}

</mosaic_0001>

<llo_original>
// kernel: attention_forward.1
$region0: #{attention_forward.1}
  #allocation0 [shape = 'u32[]', space=smem, size = 0x4, offset = 0x4, fixed_abs, tag = 'smem constant byte address 0x4 - core index']
  #allocation1 [shape = 'u32[144,128]{1,0:T(1,128)}', space=vmem, size = 0x12000, scoped, tag = 'internal scratch']
  %s0 = inlined_call_operand.vmem [shape: bf16[2,32], index: 0, kind: input, shape index: {}]
  %s1 = inlined_call_operand.vmem [shape: bf16[2,128,32], index: 1, kind: input, shape index: {}]
  %s2 = inlined_call_operand.vmem [shape: bf16[32,32], index: 2, kind: input, shape index: {}]
  %s3 = inlined_call_operand.vmem [shape: bf16[32,32], index: 3, kind: input, shape index: {}]
  %s4 = inlined_call_operand.vmem [shape: f32[1,32], index: 4, kind: input, shape index: {}]
  %s5 = inlined_call_operand.vmem [shape: bf16[1,32], index: 5, kind: input, shape index: {}]
  %s6 = inlined_call_operand.hbm [shape: f32[2,1,128], index: 6, kind: output, shape index: {}]
  %s7 = sld [smem:[#allocation0]]
  $region34: #{attention_forward.1} parent=0
    _
  %s9 = ssub.s32 1, %s7
  %s10 = scalar_select 0, %s9, %s7
  $region1: #{attention_forward.1} parent=0
    #allocation2 [shape = 'u8[1024]{0}', space=vmem, size = 0x400, scoped, tag = 'output window, operand 0, single buffered']
    #allocation3 [shape = 's32[1]{0}', space=sflag, size = 0x4, scoped, tag = 'scoped memory for attention_forward.1']
    %11 = vsyncpa [#allocation3], 0
    // Predicated region
    $region2: #{attention_forward.1} parent=1 // pred_check
      _
    $region3: #{attention_forward.1} parent=1 // pred_check_branch
      %13 = sbr.rel (0) target = $region5
    $region4: #{attention_forward.1} parent=1 // pred_region
      _
    $region5: #{attention_forward.1} parent=1 // pred_fallthru
      _
    // Predicated region
    $region6: #{attention_forward.1} parent=1 // pred_check
      _
    $region7: #{attention_forward.1} parent=1 // pred_check_branch
      %15 = sbr.rel (0) target = $region9
    $region8: #{attention_forward.1} parent=1 // pred_region
      _
    $region9: #{attention_forward.1} parent=1 // pred_fallthru
      _
    // Predicated region
    $region10: #{attention_forward.1} parent=1 // pred_check
      _
    $region11: #{attention_forward.1} parent=1 // pred_check_branch
      %17 = sbr.rel (0) target = $region13
    $region12: #{attention_forward.1} parent=1 // pred_region
      _
    $region13: #{attention_forward.1} parent=1 // pred_fallthru
      _
    // Predicated region
    $region14: #{attention_forward.1} parent=1 // pred_check
      _
    $region15: #{attention_forward.1} parent=1 // pred_check_branch
      %19 = sbr.rel (0) target = $region17
    $region16: #{attention_forward.1} parent=1 // pred_region
      _
    $region17: #{attention_forward.1} parent=1 // pred_fallthru
      _
    // Predicated region
    $region18: #{attention_forward.1} parent=1 // pred_check
      _
    $region19: #{attention_forward.1} parent=1 // pred_check_branch
      %21 = sbr.rel (0) target = $region21
    $region20: #{attention_forward.1} parent=1 // pred_region
      _
    $region21: #{attention_forward.1} parent=1 // pred_fallthru
      _
    // Predicated region
    $region22: #{attention_forward.1} parent=1 // pred_check
      _
    $region23: #{attention_forward.1} parent=1 // pred_check_branch
      %23 = sbr.rel (0) target = $region25
    $region24: #{attention_forward.1} parent=1 // pred_region
      _
    $region25: #{attention_forward.1} parent=1 // pred_fallthru
      _
    %v25 = vld [vmem:[%s0] sm:$0x1]
    %v26 = vld [vmem:[%s2] sm:$0xf]
    %v27 = vld [vmem:[%s2 + $0x4] sm:$0xf]
    %v28 = vld [vmem:[%s2 + $0x8] sm:$0xf]
    %v29 = vld [vmem:[%s2 + $0xc] sm:$0xf]
    %v30 = vld [vmem:[%s4] sm:$0x1]
    %v32 = vlaneseq
    %v33 = vshrl.u32 %v32, 7
    %v34 = vsub.s32 0, %v33
    %v35 = vrot.slane %v30, %v34
    %v41 = vunpack.c.l.b16 %v26
    %v42 = vunpack.c.l.b16 %v27
    %v43 = vunpack.c.l.b16 %v28
    %v44 = vunpack.c.l.b16 %v29
    %v45 = vpack.c.b16 %v42, %v41
    %v46 = vpack.c.b16 %v44, %v43
    %vm49 = vcmask 261120
    %v51 = vsel %vm49, %v25, 0
    %53 = vmatprep.subr.bf16.mxu0 0
    %54 = vmatpush1.bf16.msra.mxu0 %v45
    %55 = vmatprep.subr.bf16.mxu0 0
    %56 = vmatpush1.bf16.msra.mxu0 %v46
    %57 = vmatprep.subr.bf16.mxu0 0
    %58 = vmatpush1.bf16.msra.mxu0 0
    %59 = vmatprep.subr.bf16.mxu0 0
    %60 = vmatpush1.bf16.msra.mxu0 0
    %61 = vmatprep.subr.bf16.mxu0 0
    %62 = vmatpush1.bf16.msra.mxu0 0
    %63 = vmatprep.subr.bf16.mxu0 0
    %64 = vmatpush1.bf16.msra.mxu0 0
    %65 = vmatprep.subr.bf16.mxu0 0
    %66 = vmatpush1.bf16.msra.mxu0 0
    %67 = vmatprep.subr.bf16.mxu0 0
    %68 = vmatpush1.bf16.msra.mxu0 0
    %69 = vmatprep.subr.bf16.mxu0 0
    %70 = vmatpush1.bf16.msra.mxu0 0
    %71 = vmatprep.subr.bf16.mxu0 0
    %72 = vmatpush1.bf16.msra.mxu0 0
    %73 = vmatprep.subr.bf16.mxu0 0
    %74 = vmatpush1.bf16.msra.mxu0 0
    %75 = vmatprep.subr.bf16.mxu0 0
    %76 = vmatpush1.bf16.msra.mxu0 0
    %77 = vmatprep.subr.bf16.mxu0 0
    %78 = vmatpush1.bf16.msra.mxu0 0
    %79 = vmatprep.subr.bf16.mxu0 0
    %80 = vmatpush1.bf16.msra.mxu0 0
    %81 = vmatprep.subr.bf16.mxu0 0
    %82 = vmatpush1.bf16.msra.mxu0 0
    %83 = vmatprep.subr.bf16.mxu0 0
    %84 = vmatpush1.bf16.msra.mxu0 0
    %85 = vmatprep.mubr.bf16.mxu0 0
    %86 = vmatmul.mubr.bf16.gmra.mrb[0].mxu0 %v51
    %v87 = vpop.f32.mrb[0].mxu0
    %v88 = vadd.f32 %v35, %v87
    %v89 = vpop.f32.mrb[0].mxu0
    %v90 = vpop.f32.mrb[0].mxu0
    %v91 = vpop.f32.mrb[0].mxu0
    %92 = vdwg.mxu0
    %v93 = vld [vmem:[%s1] sm:$0xf]
    %v94 = vld [vmem:[%s1 + $0x4] sm:$0xf]
    %v95 = vld [vmem:[%s1 + $0x8] sm:$0xf]
    %v96 = vld [vmem:[%s1 + $0xc] sm:$0xf]
    %v97 = vld [vmem:[%s1 + $0x10] sm:$0xf]
    %v98 = vld [vmem:[%s1 + $0x14] sm:$0xf]
    %v99 = vld [vmem:[%s1 + $0x18] sm:$0xf]
    %v100 = vld [vmem:[%s1 + $0x1c] sm:$0xf]
    %v101 = vld [vmem:[%s1 + $0x20] sm:$0xf]
    %v102 = vld [vmem:[%s1 + $0x24] sm:$0xf]
    %v103 = vld [vmem:[%s1 + $0x28] sm:$0xf]
    %v104 = vld [vmem:[%s1 + $0x2c] sm:$0xf]
    %v105 = vld [vmem:[%s1 + $0x30] sm:$0xf]
    %v106 = vld [vmem:[%s1 + $0x34] sm:$0xf]
    %v107 = vld [vmem:[%s1 + $0x38] sm:$0xf]
    %v108 = vld [vmem:[%s1 + $0x3c] sm:$0xf]
    %v109 = vld [vmem:[%s1 + $0x40] sm:$0xf]
    %v110 = vld [vmem:[%s1 + $0x44] sm:$0xf]
    %v111 = vld [vmem:[%s1 + $0x48] sm:$0xf]
    %v112 = vld [vmem:[%s1 + $0x4c] sm:$0xf]
    %v113 = vld [vmem:[%s1 + $0x50] sm:$0xf]
    %v114 = vld [vmem:[%s1 + $0x54] sm:$0xf]
    %v115 = vld [vmem:[%s1 + $0x58] sm:$0xf]
    %v116 = vld [vmem:[%s1 + $0x5c] sm:$0xf]
    %v117 = vld [vmem:[%s1 + $0x60] sm:$0xf]
    %v118 = vld [vmem:[%s1 + $0x64] sm:$0xf]
    %v119 = vld [vmem:[%s1 + $0x68] sm:$0xf]
    %v120 = vld [vmem:[%s1 + $0x6c] sm:$0xf]
    %v121 = vld [vmem:[%s1 + $0x70] sm:$0xf]
    %v122 = vld [vmem:[%s1 + $0x74] sm:$0xf]
    %v123 = vld [vmem:[%s1 + $0x78] sm:$0xf]
    %v124 = vld [vmem:[%s1 + $0x7c] sm:$0xf]
    %v125 = vld [vmem:[%s3] sm:$0xf]
    %v126 = vld [vmem:[%s3 + $0x4] sm:$0xf]
    %v127 = vld [vmem:[%s3 + $0x8] sm:$0xf]
    %v128 = vld [vmem:[%s3 + $0xc] sm:$0xf]
    %v161 = vunpack.c.l.b16 %v93
    %v162 = vunpack.c.l.b16 %v94
    %v163 = vunpack.c.l.b16 %v95
    %v164 = vunpack.c.l.b16 %v96
    %v165 = vunpack.c.l.b16 %v97
    %v166 = vunpack.c.l.b16 %v98
    %v167 = vunpack.c.l.b16 %v99
    %v168 = vunpack.c.l.b16 %v100
    %v169 = vunpack.c.l.b16 %v101
    %v170 = vunpack.c.l.b16 %v102
    %v171 = vunpack.c.l.b16 %v103
    %v172 = vunpack.c.l.b16 %v104
    %v173 = vunpack.c.l.b16 %v105
    %v174 = vunpack.c.l.b16 %v106
    %v175 = vunpack.c.l.b16 %v107
    %v176 = vunpack.c.l.b16 %v108
    %v177 = vunpack.c.l.b16 %v109
    %v178 = vunpack.c.l.b16 %v110
    %v179 = vunpack.c.l.b16 %v111
    %v180 = vunpack.c.l.b16 %v112
    %v181 = vunpack.c.l.b16 %v113
    %v182 = vunpack.c.l.b16 %v114
    %v183 = vunpack.c.l.b16 %v115
    %v184 = vunpack.c.l.b16 %v116
    %v185 = vunpack.c.l.b16 %v117
    %v186 = vunpack.c.l.b16 %v118
    %v187 = vunpack.c.l.b16 %v119
    %v188 = vunpack.c.l.b16 %v120
    %v189 = vunpack.c.l.b16 %v121
    %v190 = vunpack.c.l.b16 %v122
    %v191 = vunpack.c.l.b16 %v123
    %v192 = vunpack.c.l.b16 %v124
    %v193 = vpack.c.b16 %v162, %v161
    %v194 = vpack.c.b16 %v164, %v163
    %v195 = vpack.c.b16 %v166, %v165
    %v196 = vpack.c.b16 %v168, %v167
    %v197 = vpack.c.b16 %v170, %v169
    %v198 = vpack.c.b16 %v172, %v171
    %v199 = vpack.c.b16 %v174, %v173
    %v200 = vpack.c.b16 %v176, %v175
    %v201 = vpack.c.b16 %v178, %v177
    %v202 = vpack.c.b16 %v180, %v179
    %v203 = vpack.c.b16 %v182, %v181
    %v204 = vpack.c.b16 %v184, %v183
    %v205 = vpack.c.b16 %v186, %v185
    %v206 = vpack.c.b16 %v188, %v187
    %v207 = vpack.c.b16 %v190, %v189
    %v208 = vpack.c.b16 %v192, %v191
    %v213 = vunpack.c.l.b16 %v125
    %v214 = vunpack.c.l.b16 %v126
    %v215 = vunpack.c.l.b16 %v127
    %v216 = vunpack.c.l.b16 %v128
    %v217 = vpack.c.b16 %v214, %v213
    %v218 = vpack.c.b16 %v216, %v215
    %v222 = vsel %vm49, %v193, 0
    %v225 = vsel %vm49, %v194, 0
    %v228 = vsel %vm49, %v195, 0
    %v231 = vsel %vm49, %v196, 0
    %v234 = vsel %vm49, %v197, 0
    %v237 = vsel %vm49, %v198, 0
    %v240 = vsel %vm49, %v199, 0
    %v243 = vsel %vm49, %v200, 0
    %v246 = vsel %vm49, %v201, 0
    %v249 = vsel %vm49, %v202, 0
    %v252 = vsel %vm49, %v203, 0
    %v255 = vsel %vm49, %v204, 0
    %v258 = vsel %vm49, %v205, 0
    %v261 = vsel %vm49, %v206, 0
    %v264 = vsel %vm49, %v207, 0
    %v267 = vsel %vm49, %v208, 0
    %269 = vmatprep.subr.bf16.mxu0 0
    %270 = vmatpush1.bf16.msra.mxu0 %v217
    %271 = vmatprep.subr.bf16.mxu0 0
    %272 = vmatpush1.bf16.msra.mxu0 %v218
    %273 = vmatprep.subr.bf16.mxu0 0
    %274 = vmatpush1.bf16.msra.mxu0 0
    %275 = vmatprep.subr.bf16.mxu0 0
    %276 = vmatpush1.bf16.msra.mxu0 0
    %277 = vmatprep.subr.bf16.mxu0 0
    %278 = vmatpush1.bf16.msra.mxu0 0
    %279 = vmatprep.subr.bf16.mxu0 0
    %280 = vmatpush1.bf16.msra.mxu0 0
    %281 = vmatprep.subr.bf16.mxu0 0
    %282 = vmatpush1.bf16.msra.mxu0 0
    %283 = vmatprep.subr.bf16.mxu0 0
    %284 = vmatpush1.bf16.msra.mxu0 0
    %285 = vmatprep.subr.bf16.mxu0 0
    %286 = vmatpush1.bf16.msra.mxu0 0
    %287 = vmatprep.subr.bf16.mxu0 0
    %288 = vmatpush1.bf16.msra.mxu0 0
    %289 = vmatprep.subr.bf16.mxu0 0
    %290 = vmatpush1.bf16.msra.mxu0 0
    %291 = vmatprep.subr.bf16.mxu0 0
    %292 = vmatpush1.bf16.msra.mxu0 0
    %293 = vmatprep.subr.bf16.mxu0 0
    %294 = vmatpush1.bf16.msra.mxu0 0
    %295 = vmatprep.subr.bf16.mxu0 0
    %296 = vmatpush1.bf16.msra.mxu0 0
    %297 = vmatprep.subr.bf16.mxu0 0
    %298 = vmatpush1.bf16.msra.mxu0 0
    %299 = vmatprep.subr.bf16.mxu0 0
    %300 = vmatpush1.bf16.msra.mxu0 0
    %301 = vmatprep.mubr.bf16.mxu0 0
    %302 = vmatmul.mubr.bf16.gmra.mrb[0].mxu0 %v222
    %v303 = vpop.f32.mrb[0].mxu0
    %v304 = vadd.f32 0.0, %v303
    %v305 = vpop.f32.mrb[0].mxu0
    %v306 = vpop.f32.mrb[0].mxu0
    %v307 = vadd.f32 0.0, %v306
    %v308 = vpop.f32.mrb[0].mxu0
    %309 = vmatprep.mubr.bf16.mxu0 0
    %310 = vmatmul.mubr.bf16.gmra.mrb[0].mxu0 %v225
    %v311 = vpop.f32.mrb[0].mxu0
    %v312 = vadd.f32 0.0, %v311
    %v313 = vpop.f32.mrb[0].mxu0
    %v314 = vpop.f32.mrb[0].mxu0
    %v315 = vadd.f32 0.0, %v314
    %v316 = vpop.f32.mrb[0].mxu0
    %317 = vmatprep.mubr.bf16.mxu0 0
    %318 = vmatmul.mubr.bf16.gmra.mrb[0].mxu0 %v228
    %v319 = vpop.f32.mrb[0].mxu0
    %v320 = vadd.f32 0.0, %v319
    %v321 = vpop.f32.mrb[0].mxu0
    %v322 = vpop.f32.mrb[0].mxu0
    %v323 = vadd.f32 0.0, %v322
    %v324 = vpop.f32.mrb[0].mxu0
    %325 = vmatprep.mubr.bf16.mxu0 0
    %326 = vmatmul.mubr.bf16.gmra.mrb[0].mxu0 %v231
    %v327 = vpop.f32.mrb[0].mxu0
    %v328 = vadd.f32 0.0, %v327
    %v329 = vpop.f32.mrb[0].mxu0
    %v330 = vpop.f32.mrb[0].mxu0
    %v331 = vadd.f32 0.0, %v330
    %v332 = vpop.f32.mrb[0].mxu0
    %333 = vmatprep.mubr.bf16.mxu0 0
    %334 = vmatmul.mubr.bf16.gmra.mrb[0].mxu0 %v234
    %v335 = vpop.f32.mrb[0].mxu0
    %v336 = vadd.f32 0.0, %v335
    %v337 = vpop.f32.mrb[0].mxu0
    %v338 = vpop.f32.mrb[0].mxu0
    %v339 = vadd.f32 0.0, %v338
    %v340 = vpop.f32.mrb[0].mxu0
    %341 = vmatprep.mubr.bf16.mxu0 0
    %342 = vmatmul.mubr.bf16.gmra.mrb[0].mxu0 %v237
    %v343 = vpop.f32.mrb[0].mxu0
    %v344 = vadd.f32 0.0, %v343
    %v345 = vpop.f32.mrb[0].mxu0
    %v346 = vpop.f32.mrb[0].mxu0
    %v347 = vadd.f32 0.0, %v346
    %v348 = vpop.f32.mrb[0].mxu0
    %349 = vmatprep.mubr.bf16.mxu0 0
    %350 = vmatmul.mubr.bf16.gmra.mrb[0].mxu0 %v240
    %v351 = vpop.f32.mrb[0].mxu0
    %v352 = vadd.f32 0.0, %v351
    %v353 = vpop.f32.mrb[0].mxu0
    %v354 = vpop.f32.mrb[0].mxu0
    %v355 = vadd.f32 0.0, %v354
    %v356 = vpop.f32.mrb[0].mxu0
    %357 = vmatprep.mubr.bf16.mxu0 0
    %358 = vmatmul.mubr.bf16.gmra.mrb[0].mxu0 %v243
    %v359 = vpop.f32.mrb[0].mxu0
    %v360 = vadd.f32 0.0, %v359
    %v361 = vpop.f32.mrb[0].mxu0
    %v362 = vpop.f32.mrb[0].mxu0
    %v363 = vadd.f32 0.0, %v362
    %v364 = vpop.f32.mrb[0].mxu0
    %365 = vmatprep.mubr.bf16.mxu0 0
    %366 = vmatmul.mubr.bf16.gmra.mrb[0].mxu0 %v246
    %v367 = vpop.f32.mrb[0].mxu0
    %v368 = vadd.f32 0.0, %v367
    %v369 = vpop.f32.mrb[0].mxu0
    %v370 = vpop.f32.mrb[0].mxu0
    %v371 = vadd.f32 0.0, %v370
    %v372 = vpop.f32.mrb[0].mxu0
    %373 = vmatprep.mubr.bf16.mxu0 0
    %374 = vmatmul.mubr.bf16.gmra.mrb[0].mxu0 %v249
    %v375 = vpop.f32.mrb[0].mxu0
    %v376 = vadd.f32 0.0, %v375
    %v377 = vpop.f32.mrb[0].mxu0
    %v378 = vpop.f32.mrb[0].mxu0
    %v379 = vadd.f32 0.0, %v378
    %v380 = vpop.f32.mrb[0].mxu0
    %381 = vmatprep.mubr.bf16.mxu0 0
    %382 = vmatmul.mubr.bf16.gmra.mrb[0].mxu0 %v252
    %v383 = vpop.f32.mrb[0].mxu0
    %v384 = vadd.f32 0.0, %v383
    %v385 = vpop.f32.mrb[0].mxu0
    %v386 = vpop.f32.mrb[0].mxu0
    %v387 = vadd.f32 0.0, %v386
    %v388 = vpop.f32.mrb[0].mxu0
    %389 = vmatprep.mubr.bf16.mxu0 0
    %390 = vmatmul.mubr.bf16.gmra.mrb[0].mxu0 %v255
    %v391 = vpop.f32.mrb[0].mxu0
    %v392 = vadd.f32 0.0, %v391
    %v393 = vpop.f32.mrb[0].mxu0
    %v394 = vpop.f32.mrb[0].mxu0
    %v395 = vadd.f32 0.0, %v394
    %v396 = vpop.f32.mrb[0].mxu0
    %397 = vmatprep.mubr.bf16.mxu0 0
    %398 = vmatmul.mubr.bf16.gmra.mrb[0].mxu0 %v258
    %v399 = vpop.f32.mrb[0].mxu0
    %v400 = vadd.f32 0.0, %v399
    %v401 = vpop.f32.mrb[0].mxu0
    %v402 = vpop.f32.mrb[0].mxu0
    %v403 = vadd.f32 0.0, %v402
    %v404 = vpop.f32.mrb[0].mxu0
    %405 = vmatprep.mubr.bf16.mxu0 0
    %406 = vmatmul.mubr.bf16.gmra.mrb[0].mxu0 %v261
    %v407 = vpop.f32.mrb[0].mxu0
    %v408 = vadd.f32 0.0, %v407
    %v409 = vpop.f32.mrb[0].mxu0
    %v410 = vpop.f32.mrb[0].mxu0
    %v411 = vadd.f32 0.0, %v410
    %v412 = vpop.f32.mrb[0].mxu0
    %413 = vmatprep.mubr.bf16.mxu0 0
    %414 = vmatmul.mubr.bf16.gmra.mrb[0].mxu0 %v264
    %v415 = vpop.f32.mrb[0].mxu0
    %v416 = vadd.f32 0.0, %v415
    %v417 = vpop.f32.mrb[0].mxu0
    %v418 = vpop.f32.mrb[0].mxu0
    %v419 = vadd.f32 0.0, %v418
    %v420 = vpop.f32.mrb[0].mxu0
    %421 = vmatprep.mubr.bf16.mxu0 0
    %422 = vmatmul.mubr.bf16.gmra.mrb[0].mxu0 %v267
    %v423 = vpop.f32.mrb[0].mxu0
    %v424 = vadd.f32 0.0, %v423
    %v425 = vpop.f32.mrb[0].mxu0
    %v426 = vpop.f32.mrb[0].mxu0
    %v427 = vadd.f32 0.0, %v426
    %v428 = vpop.f32.mrb[0].mxu0
    %429 = vdwg.mxu0
    %v432 = vunpack.c.l.s4 1966171168
    %v433 = vunpack.c.0.s8 %v432
    %v434 = vlaneseq
    %v435 = vshrl.u32 %v434, 7
    %v436 = vsub.s32 %v433, %v435
    %v437 = vrot.slane %v88, %v436
    %v438 = vcombine.high %v437, %v437
    %v440 = vunpack.c.l.s4 1966171168
    %v441 = vunpack.c.0.s8 %v440
    %v442 = vlaneseq
    %v443 = vshrl.u32 %v442, 7
    %v444 = vsub.s32 %v441, %v443
    %v445 = vrot.slane %v437, %v444
    %v447 = vunpack.c.l.s4 1966171168
    %v448 = vunpack.c.0.s8 %v447
    %v449 = vlaneseq
    %v450 = vshrl.u32 %v449, 7
    %v451 = vsub.s32 %v448, %v450
    %v452 = vrot.slane %v438, %v451
    %v453 = vlaneseq
    %v454 = vshrl.u32 %v453, 7
    %v455 = vsub.s32 0, %v454
    %v456 = vrot.slane %v445, %v455
    %v457 = vlaneseq
    %v458 = vshrl.u32 %v457, 7
    %v459 = vsub.s32 0, %v458
    %v460 = vrot.slane %v452, %v459
    %v463 = vadd.f32 %v304, %v456
    %v464 = vadd.f32 %v307, %v456
    %v465 = vadd.f32 %v312, %v456
    %v466 = vadd.f32 %v315, %v456
    %v467 = vadd.f32 %v320, %v456
    %v468 = vadd.f32 %v323, %v456
    %v469 = vadd.f32 %v328, %v456
    %v470 = vadd.f32 %v331, %v456
    %v471 = vadd.f32 %v336, %v456
    %v472 = vadd.f32 %v339, %v456
    %v473 = vadd.f32 %v344, %v456
    %v474 = vadd.f32 %v347, %v456
    %v475 = vadd.f32 %v352, %v456
    %v476 = vadd.f32 %v355, %v456
    %v477 = vadd.f32 %v360, %v456
    %v478 = vadd.f32 %v363, %v456
    %v479 = vadd.f32 %v368, %v460
    %v480 = vadd.f32 %v371, %v460
    %v481 = vadd.f32 %v376, %v460
    %v482 = vadd.f32 %v379, %v460
    %v483 = vadd.f32 %v384, %v460
    %v484 = vadd.f32 %v387, %v460
    %v485 = vadd.f32 %v392, %v460
    %v486 = vadd.f32 %v395, %v460
    %v487 = vadd.f32 %v400, %v460
    %v488 = vadd.f32 %v403, %v460
    %v489 = vadd.f32 %v408, %v460
    %v490 = vadd.f32 %v411, %v460
    %v491 = vadd.f32 %v416, %v460
    %v492 = vadd.f32 %v419, %v460
    %v493 = vadd.f32 %v424, %v460
    %v494 = vadd.f32 %v427, %v460
    %v495 = vtanh.pop %v463
    %v496 = vtanh.pop %v464
    %v497 = vtanh.pop %v465
    %v498 = vtanh.pop %v466
    %v499 = vtanh.pop %v467
    %v500 = vtanh.pop %v468
    %v501 = vtanh.pop %v469
    %v502 = vtanh.pop %v470
    %v503 = vtanh.pop %v471
    %v504 = vtanh.pop %v472
    %v505 = vtanh.pop %v473
    %v506 = vtanh.pop %v474
    %v507 = vtanh.pop %v475
    %v508 = vtanh.pop %v476
    %v509 = vtanh.pop %v477
    %v510 = vtanh.pop %v478
    %v511 = vtanh.pop %v479
    %v512 = vtanh.pop %v480
    %v513 = vtanh.pop %v481
    %v514 = vtanh.pop %v482
    %v515 = vtanh.pop %v483
    %v516 = vtanh.pop %v484
    %v517 = vtanh.pop %v485
    %v518 = vtanh.pop %v486
    %v519 = vtanh.pop %v487
    %v520 = vtanh.pop %v488
    %v521 = vtanh.pop %v489
    %v522 = vtanh.pop %v490
    %v523 = vtanh.pop %v491
    %v524 = vtanh.pop %v492
    %v525 = vtanh.pop %v493
    %v526 = vtanh.pop %v494
    %v527 = vld [vmem:[%s5] sm:$0x1]
    %v528 = vpack.c.bf16 %v496, %v495
    %v529 = vpack.c.bf16 %v498, %v497
    %v530 = vpack.c.bf16 %v500, %v499
    %v531 = vpack.c.bf16 %v502, %v501
    %v532 = vpack.c.bf16 %v504, %v503
    %v533 = vpack.c.bf16 %v506, %v505
    %v534 = vpack.c.bf16 %v508, %v507
    %v535 = vpack.c.bf16 %v510, %v509
    %v536 = vpack.c.bf16 %v512, %v511
    %v537 = vpack.c.bf16 %v514, %v513
    %v538 = vpack.c.bf16 %v516, %v515
    %v539 = vpack.c.bf16 %v518, %v517
    %v540 = vpack.c.bf16 %v520, %v519
    %v541 = vpack.c.bf16 %v522, %v521
    %v542 = vpack.c.bf16 %v524, %v523
    %v543 = vpack.c.bf16 %v526, %v525
    %v545 = vsel %vm49, %v527, 0
    %v548 = vsel %vm49, %v528, 0
    %v551 = vsel %vm49, %v529, 0
    %v554 = vsel %vm49, %v530, 0
    %v557 = vsel %vm49, %v531, 0
    %v560 = vsel %vm49, %v532, 0
    %v563 = vsel %vm49, %v533, 0
    %v566 = vsel %vm49, %v534, 0
    %v569 = vsel %vm49, %v535, 0
    %571 = vmatprep.subr.bf16.mxu0 0
    %572 = vmatpush1.bf16.xpose.msra.mxu0 %v548
    %573 = vmatprep.subr.bf16.mxu0 0
    %574 = vmatpush1.bf16.xpose.msra.mxu0 %v551
    %575 = vmatprep.subr.bf16.mxu0 0
    %576 = vmatpush1.bf16.xpose.msra.mxu0 %v554
    %577 = vmatprep.subr.bf16.mxu0 0
    %578 = vmatpush1.bf16.xpose.msra.mxu0 %v557
    %579 = vmatprep.subr.bf16.mxu0 0
    %580 = vmatpush1.bf16.xpose.msra.mxu0 %v560
    %581 = vmatprep.subr.bf16.mxu0 0
    %582 = vmatpush1.bf16.xpose.msra.mxu0 %v563
    %583 = vmatprep.subr.bf16.mxu0 0
    %584 = vmatpush1.bf16.xpose.msra.mxu0 %v566
    %585 = vmatprep.subr.bf16.mxu0 0
    %586 = vmatpush1.bf16.xpose.msra.mxu0 %v569
    %587 = vmatprep.subr.bf16.mxu0 0
    %588 = vmatpush1.bf16.xpose.msra.mxu0 0
    %589 = vmatprep.subr.bf16.mxu0 0
    %590 = vmatpush1.bf16.xpose.msra.mxu0 0
    %591 = vmatprep.subr.bf16.mxu0 0
    %592 = vmatpush1.bf16.xpose.msra.mxu0 0
    %593 = vmatprep.subr.bf16.mxu0 0
    %594 = vmatpush1.bf16.xpose.msra.mxu0 0
    %595 = vmatprep.subr.bf16.mxu0 0
    %596 = vmatpush1.bf16.xpose.msra.mxu0 0
    %597 = vmatprep.subr.bf16.mxu0 0
    %598 = vmatpush1.bf16.xpose.msra.mxu0 0
    %599 = vmatprep.subr.bf16.mxu0 0
    %600 = vmatpush1.bf16.xpose.msra.mxu0 0
    %601 = vmatprep.subr.bf16.mxu0 0
    %602 = vmatpush1.bf16.xpose.msra.mxu0 0
    %603 = vmatprep.mubr.bf16.mxu0 0
    %604 = vmatmul.mubr.bf16.gmra.mrb[0].mxu0 %v545
    %v605 = vpop.f32.mrb[0].mxu0
    %v606 = vadd.f32 0.0, %v605
    %v607 = vpop.f32.mrb[0].mxu0
    %v608 = vpop.f32.mrb[0].mxu0
    %v609 = vpop.f32.mrb[0].mxu0
    %610 = vdwg.mxu0
    %v612 = vsel %vm49, %v536, 0
    %v615 = vsel %vm49, %v537, 0
    %v618 = vsel %vm49, %v538, 0
    %v621 = vsel %vm49, %v539, 0
    %v624 = vsel %vm49, %v540, 0
    %v627 = vsel %vm49, %v541, 0
    %v630 = vsel %vm49, %v542, 0
    %v633 = vsel %vm49, %v543, 0
    %635 = vmatprep.subr.bf16.mxu0 0
    %636 = vmatpush1.bf16.xpose.msra.mxu0 %v612
    %637 = vmatprep.subr.bf16.mxu0 0
    %638 = vmatpush1.bf16.xpose.msra.mxu0 %v615
    %639 = vmatprep.subr.bf16.mxu0 0
    %640 = vmatpush1.bf16.xpose.msra.mxu0 %v618
    %641 = vmatprep.subr.bf16.mxu0 0
    %642 = vmatpush1.bf16.xpose.msra.mxu0 %v621
    %643 = vmatprep.subr.bf16.mxu0 0
    %644 = vmatpush1.bf16.xpose.msra.mxu0 %v624
    %645 = vmatprep.subr.bf16.mxu0 0
    %646 = vmatpush1.bf16.xpose.msra.mxu0 %v627
    %647 = vmatprep.subr.bf16.mxu0 0
    %648 = vmatpush1.bf16.xpose.msra.mxu0 %v630
    %649 = vmatprep.subr.bf16.mxu0 0
    %650 = vmatpush1.bf16.xpose.msra.mxu0 %v633
    %651 = vmatprep.subr.bf16.mxu0 0
    %652 = vmatpush1.bf16.xpose.msra.mxu0 0
    %653 = vmatprep.subr.bf16.mxu0 0
    %654 = vmatpush1.bf16.xpose.msra.mxu0 0
    %655 = vmatprep.subr.bf16.mxu0 0
    %656 = vmatpush1.bf16.xpose.msra.mxu0 0
    %657 = vmatprep.subr.bf16.mxu0 0
    %658 = vmatpush1.bf16.xpose.msra.mxu0 0
    %659 = vmatprep.subr.bf16.mxu0 0
    %660 = vmatpush1.bf16.xpose.msra.mxu0 0
    %661 = vmatprep.subr.bf16.mxu0 0
    %662 = vmatpush1.bf16.xpose.msra.mxu0 0
    %663 = vmatprep.subr.bf16.mxu0 0
    %664 = vmatpush1.bf16.xpose.msra.mxu0 0
    %665 = vmatprep.subr.bf16.mxu0 0
    %666 = vmatpush1.bf16.xpose.msra.mxu0 0
    %667 = vmatprep.mubr.bf16.mxu0 0
    %668 = vmatmul.mubr.bf16.gmra.mrb[0].mxu0 %v545
    %v669 = vpop.f32.mrb[0].mxu0
    %v670 = vadd.f32 0.0, %v669
    %v671 = vpop.f32.mrb[0].mxu0
    %v672 = vpop.f32.mrb[0].mxu0
    %v673 = vpop.f32.mrb[0].mxu0
    %674 = vdwg.mxu0
    %v675 = vlaneseq
    %v676 = vand.u32 %v675, 127
    %vm677 = vcmp.lt.s32.totalorder %v676, 8
    %v678 = vsel %vm677, %v606, -1e+30
    %v679 = vsel %vm677, %v670, -1e+30
    %vm680 = vcmask 1040384
    %v681 = vsel %vm680, %v678, -inf
    %682 = vmax.xlane.f32.xlu0 %v681
    %v683 = vpop.xlane.xlu0 %682
    %v684 = vsel %vm680, %v679, -inf
    %685 = vmax.xlane.f32.xlu0 %v684
    %v686 = vpop.xlane.xlu0 %685
    %v687 = vsub.f32 %v678, %v683
    %v688 = vsub.f32 %v679, %v686
    %v689 = vmul.f32 %v687, 1.442695
    %v690 = vpow.pop %v689
    %v691 = vmul.f32 %v688, 1.442695
    %v692 = vpow.pop %v691
    %v693 = vsel %vm680, %v690, 0.0
    %694 = vadd.xlane.f32.xlu0 %v693
    %v695 = vpop.xlane.xlu0 %694
    %v696 = vsel %vm680, %v692, 0.0
    %697 = vadd.xlane.f32.xlu0 %v696
    %v698 = vpop.xlane.xlu0 %697
    %v699 = vrcp.pop %v695
    %v700 = vrcp.pop %v698
    %v701 = vmul.f32 %v690, %v699
    %v702 = vmul.f32 %v692, %v700
    %703 = vst [vmem:[#allocation2] sm:$0x1] %v701
    %704 = vst [vmem:[#allocation2 + $0x1] sm:$0x1] %v702
    // Predicated region
    $region26: #{attention_forward.1} parent=1 // pred_check
      _
    $region27: #{attention_forward.1} parent=1 // pred_check_branch
      %706 = sbr.rel (0) target = $region29
    $region28: #{attention_forward.1} parent=1 // pred_region
      %s708 = ssub.s32 32, 32
      %709 = vsyncadd [#allocation3], %s708
      %s710 = sshll.u32 [#allocation2], 4
      %s711 = int_to_ptr.vmem [resolvable:$true] %s710
      %716 = dma.vmem_to_hbm [thread:$0]  %s711, 32, %s6, [#allocation3], 16, 16, 1
    $region29: #{attention_forward.1} parent=1 // pred_fallthru
      _
    // Predicated region
    $region30: #{attention_forward.1} parent=1 // pred_check
      _
    $region31: #{attention_forward.1} parent=1 // pred_check_branch
      %718 = sbr.rel (0) target = $region33
    $region32: #{attention_forward.1} parent=1 // pred_region
      %719 = dma.done [#allocation3], 32
    $region33: #{attention_forward.1} parent=1 // pred_fallthru
      _
    %720 = vsyncpa [#allocation3], 1

</llo_original>
